<compile_context>
chip_gen: v6e
topology: v6e:2x2x1
jax: 0.10.0
libtpu: 0.0.40
codegen_flags: <defaults>
</compile_context>

<pallas_src>
import jax
import jax.numpy as jnp
from jax.experimental import pallas as pl
from jax.experimental.pallas import tpu as pltpu


def _gates_kernel(zz_ref, w_ref, b_ref, out_ref):
    # One fused matmul over the block-diagonal weight does both gates:
    #   [N, 2D] @ [2D, 4] -> [N, 4]  ==  [gate1(z_lp) | gate2(z_hp)]
    out_ref[...] = (
        jnp.dot(zz_ref[...], w_ref[...], preferred_element_type=jnp.float32)
        + b_ref[...]
    )


def label_division_forward(z_lp, z_hp, w1, b1, w2, b2):
    """Pallas implementation of LabelDivision.forward.

    Args:
      z_lp, z_hp: [N, D] float32 activations.
      w1, w2:     [D, 2] float32 weights (transposed PyTorch layout).
      b1, b2:     [2]    float32 biases.

    Returns:
      (x_lp, x_hp), each [N, 2] float32.
    """
    n, d = z_lp.shape
    assert z_hp.shape == (n, d)
    assert w1.shape == (d, 2) and w2.shape == (d, 2)

    # --- wrapper-side packing (plain XLA ops, fused/constant-folded under jit) ---
    # Activations: one [N, 2D] slab -> single input DMA instead of two.
    zz = jnp.concatenate([z_lp, z_hp], axis=1)
    # Weights: block-diagonal [2D, 4] so one matmul computes both gates.
    w_blk = jnp.zeros((2 * d, 4), jnp.float32)
    w_blk = w_blk.at[:d, :2].set(w1)
    w_blk = w_blk.at[d:, 2:].set(w2)
    # Biases: single [1, 4] operand (one DMA, one broadcast).
    b_all = jnp.concatenate([b1, b2]).reshape(1, 4)

    # Single-shot pallas_call: no grid, no pipeline; whole arrays live in VMEM.
    out = pl.pallas_call(
        _gates_kernel,
        out_shape=jax.ShapeDtypeStruct((n, 4), jnp.float32),
        in_specs=[
            pl.BlockSpec(memory_space=pltpu.MemorySpace.VMEM),
            pl.BlockSpec(memory_space=pltpu.MemorySpace.VMEM),
            pl.BlockSpec(memory_space=pltpu.MemorySpace.VMEM),
        ],
        out_specs=pl.BlockSpec(memory_space=pltpu.MemorySpace.VMEM),
    )(zz, w_blk, b_all)

    # Split the packed [N, 4] output back into the two gate outputs.
    return out[:, :2], out[:, 2:]


def xavier_uniform(key, shape, gain):
    # PyTorch xavier_uniform_ for Linear weight [out_features, in_features]:
    # bound = gain * sqrt(6 / (fan_in + fan_out))
    fan_out, fan_in = shape
    bound = gain * jnp.sqrt(6.0 / (fan_in + fan_out))
    return jax.random.uniform(key, shape, jnp.float32, -bound, bound)


if __name__ == "__main__":
    # Small synthetic config mirroring the module's __init__:
    #   hidden_dim=32, nlayers=2, input_dim=16  ->  D = 32*2 + 16 = 80
    hidden_dim, nlayers, input_dim = 32, 2, 16
    D = hidden_dim * nlayers + input_dim
    N = 8  # number of nodes / rows

    key = jax.random.PRNGKey(0)
    k_zlp, k_zhp, k_w1, k_w2, k_b1, k_b2 = jax.random.split(key, 6)

    z_lp = jax.random.normal(k_zlp, (N, D), dtype=jnp.float32)
    z_hp = jax.random.normal(k_zhp, (N, D), dtype=jnp.float32)

    gain = 1.414  # literal value used in the PyTorch module
    # PyTorch weight layout is [2, D]; transpose to [D, 2] for x @ W.
    w1_pt = xavier_uniform(k_w1, (2, D), gain)
    w2_pt = xavier_uniform(k_w2, (2, D), gain)
    w1 = w1_pt.T
    w2 = w2_pt.T
    # nn.Linear default bias init: U(-1/sqrt(fan_in), 1/sqrt(fan_in))
    b_bound = 1.0 / jnp.sqrt(jnp.float32(D))
    b1 = jax.random.uniform(k_b1, (2,), jnp.float32, -b_bound, b_bound)
    b2 = jax.random.uniform(k_b2, (2,), jnp.float32, -b_bound, b_bound)

    x_lp, x_hp = label_division_forward(z_lp, z_hp, w1, b1, w2, b2)
    jax.block_until_ready((x_lp, x_hp))

    # Pure-JAX reference check.
    ref_lp = z_lp @ w1 + b1
    ref_hp = z_hp @ w2 + b2
    assert jnp.allclose(x_lp, ref_lp, atol=1e-5, rtol=1e-5)
    assert jnp.allclose(x_hp, ref_hp, atol=1e-5, rtol=1e-5)
    assert x_lp.shape == (N, 2) and x_hp.shape == (N, 2)

    # TODO(synk): `division()` (argsort / set-difference / data-dependent label
    # correction) is host-side control flow, not part of forward(); not ported.

    print("KERNEL_OK")
</pallas_src>

<mosaic_0001>
module attributes {stable_mosaic.version = 11 : i64} {
  func.func @_gates_kernel(%arg0: memref<8x160xf32, #tpu.memory_space<vmem>>, %arg1: memref<160x4xf32, #tpu.memory_space<vmem>>, %arg2: memref<1x4xf32, #tpu.memory_space<vmem>>, %arg3: memref<8x4xf32, #tpu.memory_space<vmem>>) attributes {dimension_semantics = [], scalar_prefetch = 0 : i64, scratch_operands = 0 : i64, tpu.core_type = #tpu.core_type<tc>} {
    %c0 = arith.constant 0 : index
    %c0_0 = arith.constant 0 : index
    %0 = vector.load %arg0[%c0, %c0_0] : memref<8x160xf32, #tpu.memory_space<vmem>>, vector<8x160xf32>
    %c0_1 = arith.constant 0 : index
    %c0_2 = arith.constant 0 : index
    %1 = vector.load %arg1[%c0_1, %c0_2] : memref<160x4xf32, #tpu.memory_space<vmem>>, vector<160x4xf32>
    %cst = arith.constant dense<0.000000e+00> : vector<8x4xf32>
    %2 = tpu.matmul %0, %1, %cst {dimension_numbers = #tpu.dot_dimension_numbers<[1], [0], [0], [1], [0, 0, 1, 1], [], []>} : vector<8x160xf32>, vector<160x4xf32>, vector<8x4xf32> -> vector<8x4xf32>
    %c0_3 = arith.constant 0 : index
    %c0_4 = arith.constant 0 : index
    %3 = vector.load %arg2[%c0_3, %c0_4] : memref<1x4xf32, #tpu.memory_space<vmem>>, vector<1x4xf32>
    %4 = vector.broadcast %3 : vector<1x4xf32> to vector<8x4xf32>
    %5 = arith.addf %2, %4 : vector<8x4xf32>
    %c0_5 = arith.constant 0 : index
    %c0_6 = arith.constant 0 : index
    %6 = vector.load %arg3[%c0_5, %c0_6] : memref<8x4xf32, #tpu.memory_space<vmem>>, vector<8x4xf32>
    tpu.vector_store %arg3[%c0_5, %c0_6], %5 {strides = array<i32>} : memref<8x4xf32, #tpu.memory_space<vmem>>, vector<8x4xf32>,
    return
  }
}

</mosaic_0001>

<llo_original>
// kernel: tpu_custom_call.1
$region0: #{tpu_custom_call.1}
  #allocation0 [shape = 'u32[]', space=smem, size = 0x4, offset = 0x4, fixed_abs, tag = 'smem constant byte address 0x4 - core index']
  #allocation1 [shape = 'u32[144,128]{1,0:T(1,128)}', space=vmem, size = 0x12000, scoped, tag = 'internal scratch']
  %s0 = inlined_call_operand.vmem [shape: f32[8,160], index: 0, kind: input, shape index: {}]
  %s1 = inlined_call_operand.vmem [shape: f32[160,4], index: 1, kind: input, shape index: {}]
  %s2 = inlined_call_operand.vmem [shape: f32[1,4], index: 2, kind: input, shape index: {}]
  %s3 = inlined_call_operand.vmem [shape: f32[8,4], index: 3, kind: output, shape index: {}]
  %s4 = sld [smem:[#allocation0]]
  $region22: #{tpu_custom_call.1} parent=0
    _
  %s6 = ssub.s32 1, %s4
  %s7 = scalar_select 0, %s6, %s4
  // Predicated region
  $region2: #{tpu_custom_call.1} parent=0 // pred_check
    _
  $region3: #{tpu_custom_call.1} parent=0 // pred_check_branch
    %9 = sbr.rel (0) target = $region5
  $region4: #{tpu_custom_call.1} parent=0 // pred_region
    _
  $region5: #{tpu_custom_call.1} parent=0 // pred_fallthru
    _
  // Predicated region
  $region6: #{tpu_custom_call.1} parent=0 // pred_check
    _
  $region7: #{tpu_custom_call.1} parent=0 // pred_check_branch
    %11 = sbr.rel (0) target = $region9
  $region8: #{tpu_custom_call.1} parent=0 // pred_region
    _
  $region9: #{tpu_custom_call.1} parent=0 // pred_fallthru
    _
  // Predicated region
  $region10: #{tpu_custom_call.1} parent=0 // pred_check
    _
  $region11: #{tpu_custom_call.1} parent=0 // pred_check_branch
    %13 = sbr.rel (0) target = $region13
  $region12: #{tpu_custom_call.1} parent=0 // pred_region
    _
  $region13: #{tpu_custom_call.1} parent=0 // pred_fallthru
    _
  %v14 = vld [vmem:[%s0] sm:$0xff]
  %v15 = vld [vmem:[%s0 + $0x8] sm:$0xff]
  %v16 = vld [vmem:[%s1] sm:$0xff]
  %v17 = vld [vmem:[%s1 + $0x8] sm:$0xff]
  %v18 = vld [vmem:[%s1 + $0x10] sm:$0xff]
  %v19 = vld [vmem:[%s1 + $0x18] sm:$0xff]
  %v20 = vld [vmem:[%s1 + $0x20] sm:$0xff]
  %v21 = vld [vmem:[%s1 + $0x28] sm:$0xff]
  %v22 = vld [vmem:[%s1 + $0x30] sm:$0xff]
  %v23 = vld [vmem:[%s1 + $0x38] sm:$0xff]
  %v24 = vld [vmem:[%s1 + $0x40] sm:$0xff]
  %v25 = vld [vmem:[%s1 + $0x48] sm:$0xff]
  %v26 = vld [vmem:[%s1 + $0x50] sm:$0xff]
  %v27 = vld [vmem:[%s1 + $0x58] sm:$0xff]
  %v28 = vld [vmem:[%s1 + $0x60] sm:$0xff]
  %v29 = vld [vmem:[%s1 + $0x68] sm:$0xff]
  %v30 = vld [vmem:[%s1 + $0x70] sm:$0xff]
  %v31 = vld [vmem:[%s1 + $0x78] sm:$0xff]
  %v32 = vld [vmem:[%s1 + $0x80] sm:$0xff]
  %v33 = vld [vmem:[%s1 + $0x88] sm:$0xff]
  %v34 = vld [vmem:[%s1 + $0x90] sm:$0xff]
  %v35 = vld [vmem:[%s1 + $0x98] sm:$0xff]
  %v36 = vld [vmem:[%s2] sm:$0x1]
  %v38 = vlaneseq
  %v39 = vshrl.u32 %v38, 7
  %v40 = vsub.s32 0, %v39
  %v41 = vrot.slane %v36, %v40
  %vm43 = vcmask 261120
  %v45 = vsel %vm43, %v15, 0
  %47 = vmatprep.subr.mxu0 0.0
  %48 = vmatpush1.msra.mxu0 %v31
  %49 = vmatprep.subr.mxu0 0.0
  %50 = vmatpush1.msra.mxu0 %v30
  %51 = vmatprep.subr.mxu0 0.0
  %52 = vmatpush1.msra.mxu0 %v29
  %53 = vmatprep.subr.mxu0 0.0
  %54 = vmatpush1.msra.mxu0 %v28
  %55 = vmatprep.subr.mxu0 0.0
  %56 = vmatpush1.msra.mxu0 %v27
  %57 = vmatprep.subr.mxu0 0.0
  %58 = vmatpush1.msra.mxu0 %v26
  %59 = vmatprep.subr.mxu0 0.0
  %60 = vmatpush1.msra.mxu0 %v25
  %61 = vmatprep.subr.mxu0 0.0
  %62 = vmatpush1.msra.mxu0 %v24
  %63 = vmatprep.subr.mxu0 0.0
  %64 = vmatpush1.msra.mxu0 %v23
  %65 = vmatprep.subr.mxu0 0.0
  %66 = vmatpush1.msra.mxu0 %v22
  %67 = vmatprep.subr.mxu0 0.0
  %68 = vmatpush1.msra.mxu0 %v21
  %69 = vmatprep.subr.mxu0 0.0
  %70 = vmatpush1.msra.mxu0 %v20
  %71 = vmatprep.subr.mxu0 0.0
  %72 = vmatpush1.msra.mxu0 %v19
  %73 = vmatprep.subr.mxu0 0.0
  %74 = vmatpush1.msra.mxu0 %v18
  %75 = vmatprep.subr.mxu0 0.0
  %76 = vmatpush1.msra.mxu0 %v17
  %77 = vmatprep.subr.mxu0 0.0
  %78 = vmatpush1.msra.mxu0 %v16
  %79 = vmatprep.subr.mxu0 0.0
  %80 = vmatpush2.msra.mxu0 0.0
  %81 = vmatprep.subr.mxu0 0.0
  %82 = vmatpush2.msra.mxu0 0.0
  %83 = vmatprep.subr.mxu0 0.0
  %84 = vmatpush2.msra.mxu0 0.0
  %85 = vmatprep.subr.mxu0 0.0
  %86 = vmatpush2.msra.mxu0 0.0
  %87 = vmatprep.subr.mxu0 0.0
  %88 = vmatpush2.msra.mxu0 0.0
  %89 = vmatprep.subr.mxu0 0.0
  %90 = vmatpush2.msra.mxu0 0.0
  %91 = vmatprep.subr.mxu0 0.0
  %92 = vmatpush2.msra.mxu0 0.0
  %93 = vmatprep.subr.mxu0 0.0
  %94 = vmatpush2.msra.mxu0 0.0
  %95 = vmatprep.subr.mxu0 0.0
  %96 = vmatpush2.msra.mxu0 0.0
  %97 = vmatprep.subr.mxu0 0.0
  %98 = vmatpush2.msra.mxu0 0.0
  %99 = vmatprep.subr.mxu0 0.0
  %100 = vmatpush2.msra.mxu0 0.0
  %101 = vmatprep.subr.mxu0 0.0
  %102 = vmatpush2.msra.mxu0 0.0
  %103 = vmatprep.subr.mxu0 0.0
  %104 = vmatpush2.msra.mxu0 %v35
  %105 = vmatprep.subr.mxu0 0.0
  %106 = vmatpush2.msra.mxu0 %v34
  %107 = vmatprep.subr.mxu0 0.0
  %108 = vmatpush2.msra.mxu0 %v33
  %109 = vmatprep.subr.mxu0 0.0
  %110 = vmatpush2.msra.mxu0 %v32
  %111 = vmatprep.mubr.f32.mxu0 %v45
  %112 = vmatmul.mubr.f32.gmra.mxu0 %v14
  %v113 = vpop.f32.mrf.mxu0
  %v114 = vadd.f32 %v41, %v113
  %v115 = vpop.f32.mrf.mxu0
  %116 = vdwg.mxu0
  %vm117 = vcmask 31744
  %118 = vst.msk [vmem:[%s3] sm:$0xff] %vm117, %v114
  // Predicated region
  $region14: #{tpu_custom_call.1} parent=0 // pred_check
    _
  $region15: #{tpu_custom_call.1} parent=0 // pred_check_branch
    %120 = sbr.rel (0) target = $region17
  $region16: #{tpu_custom_call.1} parent=0 // pred_region
    _
  $region17: #{tpu_custom_call.1} parent=0 // pred_fallthru
    _
  // Predicated region
  $region18: #{tpu_custom_call.1} parent=0 // pred_check
    _
  $region19: #{tpu_custom_call.1} parent=0 // pred_check_branch
    %122 = sbr.rel (0) target = $region21
  $region20: #{tpu_custom_call.1} parent=0 // pred_region
    _
  $region21: #{tpu_custom_call.1} parent=0 // pred_fallthru
    _

</llo_original>
